<compile_context>
chip_gen: v7x
topology: tpu7x:2x2x1
jax: 0.10.0
libtpu: 0.0.40
codegen_flags: <defaults>
</compile_context>

<pallas_src>
import jax
import jax.numpy as jnp
from jax.experimental import pallas as pl
from jax.experimental.pallas import tpu as pltpu


def gmu_kernel(xl_ref, xa_ref, xv_ref,
               wl_ref, wa_ref, wv_ref,
               wgl_ref, wga_ref, wgv_ref,
               bl_ref, ba_ref, bv_ref, bg_ref,
               fusion_ref, gates_ref):
    """Fused GMU forward for one batch tile (all operands VMEM-resident)."""
    xl = xl_ref[...]                                  # (TB, dim_l)  matmul dtype
    xa = xa_ref[...]                                  # (TB, dim_a)
    xv = xv_ref[...]                                  # (TB, dim_v)

    # Per-modality transforms: MXU dots with f32 accumulation, f32 bias + tanh.
    h_l = jnp.tanh(jnp.dot(xl, wl_ref[...], preferred_element_type=jnp.float32)
                   + bl_ref[...])
    h_a = jnp.tanh(jnp.dot(xa, wa_ref[...], preferred_element_type=jnp.float32)
                   + ba_ref[...])
    h_v = jnp.tanh(jnp.dot(xv, wv_ref[...], preferred_element_type=jnp.float32)
                   + bv_ref[...])

    # Gate logits == Linear(cat([x_l, x_a, x_v])), computed as a K-split sum so
    # no activation concatenation is needed anywhere.
    logits = (jnp.dot(xl, wgl_ref[...], preferred_element_type=jnp.float32)
              + jnp.dot(xa, wga_ref[...], preferred_element_type=jnp.float32)
              + jnp.dot(xv, wgv_ref[...], preferred_element_type=jnp.float32)
              + bg_ref[...])                          # (TB, 3), f32

    # Softmax over the 3 gates (exact division: gates are a returned output).
    m = jnp.max(logits, axis=-1, keepdims=True)
    e = jnp.exp(logits - m)
    gates = e / jnp.sum(e, axis=-1, keepdims=True)

    fusion = (gates[:, 0:1] * h_l
              + gates[:, 1:2] * h_a
              + gates[:, 2:3] * h_v)

    # TODO(synk): training-mode dropout (p=0.3) not implemented (eval = identity).
    fusion_ref[...] = fusion.astype(fusion_ref.dtype)
    gates_ref[...] = gates.astype(gates_ref.dtype)


def _tpu_vmem_and_cores():
    """Best-effort query of per-core VMEM capacity and TensorCores per chip."""
    vmem_cap = 64 * 1024 * 1024   # conservative default (v7x physical)
    cores = 1
    try:
        info = pltpu.get_tpu_info()
        vmem_cap = int(getattr(info, "vmem_capacity_bytes", vmem_cap)) or vmem_cap
        for name in ("num_cores", "tensor_cores_per_chip", "cores_per_chip"):
            val = getattr(info, name, None)
            if isinstance(val, int) and val > 0:
                cores = val
                break
    except Exception:
        pass
    try:
        d = jax.devices()[0]
        val = getattr(d, "num_cores", None)
        if isinstance(val, int) and val > 0:
            cores = max(cores, val)
    except Exception:
        pass
    return vmem_cap, cores


def _choose_batch_tile(batch, per_row_bytes, resident_bytes, vmem_budget, num_cores):
    """Largest batch tile (<=1024) fitting the VMEM budget; multi-core aware.

    Resulting tile is always a multiple of 8 or equal to the full batch, so the
    (8,128) block constraint is never violated.
    """
    tb = 1024
    while tb > 8 and resident_bytes + 2 * tb * per_row_bytes > vmem_budget:
        tb //= 2
    # Megacore (v7x, 2 TCs): keep >= 2 grid steps per core so the "parallel"
    # batch axis actually shards across TensorCores.
    if num_cores > 1 and batch >= 16 * num_cores:
        cap = (batch // (2 * num_cores)) // 8 * 8
        if cap >= 8:
            tb = min(tb, cap)
    if batch < 8:
        return batch                 # full-dim block (valid even if < 8)
    return max(8, min(tb, batch))


def gated_multimodal_unit(x_l, x_a, x_v, params, *, matmul_dtype=jnp.bfloat16):
    """GMU forward pass as one Pallas kernel with a pipelined batch grid."""
    B = x_l.shape[0]
    dim_l, dim_a, dim_v = x_l.shape[1], x_a.shape[1], x_v.shape[1]
    D = params["w_l"].shape[1]
    dim_cat = dim_l + dim_a + dim_v
    in_bytes = jnp.dtype(matmul_dtype).itemsize

    # Streamed activations (bf16 by default) and resident parameters.
    xs = [x.astype(matmul_dtype) for x in (x_l, x_a, x_v)]
    ws = [params[k].astype(matmul_dtype) for k in ("w_l", "w_a", "w_v")]
    wgs = [params[k].astype(matmul_dtype) for k in ("wg_l", "wg_a", "wg_v")]
    bs = [params[k].astype(jnp.float32) for k in ("b_l", "b_a", "b_v", "bg")]

    vmem_cap, num_cores = _tpu_vmem_and_cores()
    vmem_budget = int(0.75 * vmem_cap)           # ~48 MiB on v7x, ~96 MiB on v5e/v6e

    # Resident params (counted double-buffered: Mosaic's default for any block).
    resident_bytes = 2 * (dim_cat * D * in_bytes          # transform weights
                          + dim_cat * 3 * in_bytes        # gate weights
                          + (3 * D + 3) * 4)              # f32 biases
    per_row_bytes = dim_cat * in_bytes + (D + 3) * 4      # streamed in + out per row

    tb = _choose_batch_tile(B, per_row_bytes, resident_bytes, vmem_budget, num_cores)
    grid = (pl.cdiv(B, tb),)

    cost = pl.CostEstimate(
        flops=int(2 * B * dim_cat * D + 2 * B * dim_cat * 3 + 8 * B * D),
        transcendentals=int(B * (3 * D + 3)),
        bytes_accessed=int(B * dim_cat * in_bytes
                           + dim_cat * (D + 3) * in_bytes
                           + (3 * D + 3) * 4
                           + B * (D + 3) * 4),
    )

    stream_spec = lambda d: pl.BlockSpec((tb, d), lambda i: (i, 0))
    resident_spec = lambda shape: pl.BlockSpec(shape, lambda i: (0, 0))

    in_specs = (
        [stream_spec(dim_l), stream_spec(dim_a), stream_spec(dim_v)]
        + [resident_spec((dim_l, D)), resident_spec((dim_a, D)), resident_spec((dim_v, D))]
        + [resident_spec((dim_l, 3)), resident_spec((dim_a, 3)), resident_spec((dim_v, 3))]
        + [resident_spec((1, D)), resident_spec((1, D)), resident_spec((1, D)),
           resident_spec((1, 3))]
    )
    out_specs = [pl.BlockSpec((tb, D), lambda i: (i, 0)),
                 pl.BlockSpec((tb, 3), lambda i: (i, 0))]

    fusion, gates = pl.pallas_call(
        gmu_kernel,
        out_shape=(jax.ShapeDtypeStruct((B, D), jnp.float32),
                   jax.ShapeDtypeStruct((B, 3), jnp.float32)),
        grid=grid,
        in_specs=in_specs,
        out_specs=out_specs,
        compiler_params=pltpu.CompilerParams(
            dimension_semantics=("parallel",),
            vmem_limit_bytes=vmem_budget),
        cost_estimate=cost,
    )(*xs, *ws, *wgs, *bs)

    return fusion, gates


def init_params(key, dim_l, dim_a, dim_v, output_dim):
    """Deterministic init mimicking PyTorch nn.Linear defaults (U(-1/sqrt(fan_in), ..))."""
    def linear(key, fan_in, fan_out):
        kw, kb = jax.random.split(key)
        bound = 1.0 / jnp.sqrt(fan_in)
        w = jax.random.uniform(kw, (fan_in, fan_out), jnp.float32, -bound, bound)
        b = jax.random.uniform(kb, (1, fan_out), jnp.float32, -bound, bound)
        return w, b

    k1, k2, k3, k4 = jax.random.split(key, 4)
    w_l, b_l = linear(k1, dim_l, output_dim)
    w_a, b_a = linear(k2, dim_a, output_dim)
    w_v, b_v = linear(k3, dim_v, output_dim)

    dim_cat = dim_l + dim_a + dim_v
    wg, _ = linear(k4, dim_cat, 3)
    bg = jnp.ones((1, 3), jnp.float32)      # gate_l.bias.data = [1.0, 1.0, 1.0]

    return {
        "w_l": w_l, "b_l": b_l,
        "w_a": w_a, "b_a": b_a,
        "w_v": w_v, "b_v": b_v,
        # gate weight split into per-modality row blocks of cat([x_l, x_a, x_v])
        "wg_l": wg[:dim_l, :],
        "wg_a": wg[dim_l:dim_l + dim_a, :],
        "wg_v": wg[dim_l + dim_a:, :],
        "bg": bg,
    }


def reference_forward(x_l, x_a, x_v, p, *, matmul_dtype=jnp.float32):
    """Pure-JAX reference (eval mode); matmul operands quantized like the kernel."""
    def q(a):
        return a.astype(matmul_dtype).astype(jnp.float32)

    h_l = jnp.tanh(q(x_l) @ q(p["w_l"]) + p["b_l"])
    h_a = jnp.tanh(q(x_a) @ q(p["w_a"]) + p["b_a"])
    h_v = jnp.tanh(q(x_v) @ q(p["w_v"]) + p["b_v"])
    logits = (q(x_l) @ q(p["wg_l"]) + q(x_a) @ q(p["wg_a"])
              + q(x_v) @ q(p["wg_v"]) + p["bg"])
    gates = jax.nn.softmax(logits, axis=1)
    g_l, g_a, g_v = gates[:, 0:1], gates[:, 1:2], gates[:, 2:3]
    return g_l * h_l + g_a * h_a + g_v * h_v, gates


if __name__ == "__main__":
    B, dim_l, dim_a, dim_v, output_dim = 8, 16, 8, 24, 32

    key = jax.random.PRNGKey(0)
    kp, kl, ka, kv = jax.random.split(key, 4)

    params = init_params(kp, dim_l, dim_a, dim_v, output_dim)
    x_l = jax.random.normal(kl, (B, dim_l), jnp.float32)
    x_a = jax.random.normal(ka, (B, dim_a), jnp.float32)
    x_v = jax.random.normal(kv, (B, dim_v), jnp.float32)

    fusion, gates = gated_multimodal_unit(x_l, x_a, x_v, params,
                                          matmul_dtype=jnp.bfloat16)
    jax.block_until_ready((fusion, gates))

    # Reference quantizes matmul operands identically (bf16), so tolerances can
    # stay tight; this checks the kernel math, not the intentional bf16 cast.
    ref_fusion, ref_gates = reference_forward(x_l, x_a, x_v, params,
                                              matmul_dtype=jnp.bfloat16)
    assert fusion.shape == (B, output_dim) and gates.shape == (B, 3)
    assert jnp.allclose(fusion, ref_fusion, atol=1e-3, rtol=1e-3), "fusion mismatch"
    assert jnp.allclose(gates, ref_gates, atol=1e-3, rtol=1e-3), "gates mismatch"

    print("KERNEL_OK")
</pallas_src>

<mosaic_0001>
module attributes {stable_mosaic.version = 11 : i64} {
  func.func @gmu_kernel(%arg0: i32, %arg1: memref<8x16xbf16, #tpu.memory_space<vmem>>, %arg2: memref<8x8xbf16, #tpu.memory_space<vmem>>, %arg3: memref<8x24xbf16, #tpu.memory_space<vmem>>, %arg4: memref<16x32xbf16, #tpu.memory_space<vmem>>, %arg5: memref<8x32xbf16, #tpu.memory_space<vmem>>, %arg6: memref<24x32xbf16, #tpu.memory_space<vmem>>, %arg7: memref<16x3xbf16, #tpu.memory_space<vmem>>, %arg8: memref<8x3xbf16, #tpu.memory_space<vmem>>, %arg9: memref<24x3xbf16, #tpu.memory_space<vmem>>, %arg10: memref<1x32xf32, #tpu.memory_space<vmem>>, %arg11: memref<1x32xf32, #tpu.memory_space<vmem>>, %arg12: memref<1x32xf32, #tpu.memory_space<vmem>>, %arg13: memref<1x3xf32, #tpu.memory_space<vmem>>, %arg14: memref<8x32xf32, #tpu.memory_space<vmem>>, %arg15: memref<8x3xf32, #tpu.memory_space<vmem>>) attributes {dimension_semantics = [#tpu.dimension_semantics<parallel>], iteration_bounds = array<i64: 1>, scalar_prefetch = 0 : i64, scratch_operands = 0 : i64, tpu.core_type = #tpu.core_type<tc>, window_params = [{transform_indices = @transform_0, window_bounds = array<i64: 8, 16>}, {transform_indices = @transform_1, window_bounds = array<i64: 8, 8>}, {transform_indices = @transform_2, window_bounds = array<i64: 8, 24>}, {pipeline_mode = #tpu.pipeline_mode<synchronous>, transform_indices = @transform_3, window_bounds = array<i64: 16, 32>}, {pipeline_mode = #tpu.pipeline_mode<synchronous>, transform_indices = @transform_4, window_bounds = array<i64: 8, 32>}, {pipeline_mode = #tpu.pipeline_mode<synchronous>, transform_indices = @transform_5, window_bounds = array<i64: 24, 32>}, {pipeline_mode = #tpu.pipeline_mode<synchronous>, transform_indices = @transform_6, window_bounds = array<i64: 16, 3>}, {pipeline_mode = #tpu.pipeline_mode<synchronous>, transform_indices = @transform_7, window_bounds = array<i64: 8, 3>}, {pipeline_mode = #tpu.pipeline_mode<synchronous>, transform_indices = @transform_8, window_bounds = array<i64: 24, 3>}, {pipeline_mode = #tpu.pipeline_mode<synchronous>, transform_indices = @transform_9, window_bounds = array<i64: 1, 32>}, {pipeline_mode = #tpu.pipeline_mode<synchronous>, transform_indices = @transform_10, window_bounds = array<i64: 1, 32>}, {pipeline_mode = #tpu.pipeline_mode<synchronous>, transform_indices = @transform_11, window_bounds = array<i64: 1, 32>}, {pipeline_mode = #tpu.pipeline_mode<synchronous>, transform_indices = @transform_12, window_bounds = array<i64: 1, 3>}, {transform_indices = @transform_13, window_bounds = array<i64: 8, 32>}, {transform_indices = @transform_14, window_bounds = array<i64: 8, 3>}]} {
    %c0 = arith.constant 0 : index
    %c0_0 = arith.constant 0 : index
    %0 = vector.load %arg1[%c0, %c0_0] : memref<8x16xbf16, #tpu.memory_space<vmem>>, vector<8x16xbf16>
    %c0_1 = arith.constant 0 : index
    %c0_2 = arith.constant 0 : index
    %1 = vector.load %arg2[%c0_1, %c0_2] : memref<8x8xbf16, #tpu.memory_space<vmem>>, vector<8x8xbf16>
    %c0_3 = arith.constant 0 : index
    %c0_4 = arith.constant 0 : index
    %2 = vector.load %arg3[%c0_3, %c0_4] : memref<8x24xbf16, #tpu.memory_space<vmem>>, vector<8x24xbf16>
    %c0_5 = arith.constant 0 : index
    %c0_6 = arith.constant 0 : index
    %3 = vector.load %arg4[%c0_5, %c0_6] : memref<16x32xbf16, #tpu.memory_space<vmem>>, vector<16x32xbf16>
    %cst = arith.constant dense<0.000000e+00> : vector<8x32xf32>
    %4 = tpu.matmul %0, %3, %cst {dimension_numbers = #tpu.dot_dimension_numbers<[1], [0], [0], [1], [0, 0, 1, 1], [], []>} : vector<8x16xbf16>, vector<16x32xbf16>, vector<8x32xf32> -> vector<8x32xf32>
    %c0_7 = arith.constant 0 : index
    %c0_8 = arith.constant 0 : index
    %5 = vector.load %arg10[%c0_7, %c0_8] : memref<1x32xf32, #tpu.memory_space<vmem>>, vector<1x32xf32>
    %6 = vector.broadcast %5 : vector<1x32xf32> to vector<8x32xf32>
    %7 = arith.addf %4, %6 : vector<8x32xf32>
    %8 = math.tanh %7 : vector<8x32xf32>
    %c0_9 = arith.constant 0 : index
    %c0_10 = arith.constant 0 : index
    %9 = vector.load %arg5[%c0_9, %c0_10] : memref<8x32xbf16, #tpu.memory_space<vmem>>, vector<8x32xbf16>
    %cst_11 = arith.constant dense<0.000000e+00> : vector<8x32xf32>
    %10 = tpu.matmul %1, %9, %cst_11 {dimension_numbers = #tpu.dot_dimension_numbers<[1], [0], [0], [1], [0, 0, 1, 1], [], []>} : vector<8x8xbf16>, vector<8x32xbf16>, vector<8x32xf32> -> vector<8x32xf32>
    %c0_12 = arith.constant 0 : index
    %c0_13 = arith.constant 0 : index
    %11 = vector.load %arg11[%c0_12, %c0_13] : memref<1x32xf32, #tpu.memory_space<vmem>>, vector<1x32xf32>
    %12 = vector.broadcast %11 : vector<1x32xf32> to vector<8x32xf32>
    %13 = arith.addf %10, %12 : vector<8x32xf32>
    %14 = math.tanh %13 : vector<8x32xf32>
    %c0_14 = arith.constant 0 : index
    %c0_15 = arith.constant 0 : index
    %15 = vector.load %arg6[%c0_14, %c0_15] : memref<24x32xbf16, #tpu.memory_space<vmem>>, vector<24x32xbf16>
    %cst_16 = arith.constant dense<0.000000e+00> : vector<8x32xf32>
    %16 = tpu.matmul %2, %15, %cst_16 {dimension_numbers = #tpu.dot_dimension_numbers<[1], [0], [0], [1], [0, 0, 1, 1], [], []>} : vector<8x24xbf16>, vector<24x32xbf16>, vector<8x32xf32> -> vector<8x32xf32>
    %c0_17 = arith.constant 0 : index
    %c0_18 = arith.constant 0 : index
    %17 = vector.load %arg12[%c0_17, %c0_18] : memref<1x32xf32, #tpu.memory_space<vmem>>, vector<1x32xf32>
    %18 = vector.broadcast %17 : vector<1x32xf32> to vector<8x32xf32>
    %19 = arith.addf %16, %18 : vector<8x32xf32>
    %20 = math.tanh %19 : vector<8x32xf32>
    %c0_19 = arith.constant 0 : index
    %c0_20 = arith.constant 0 : index
    %21 = vector.load %arg7[%c0_19, %c0_20] : memref<16x3xbf16, #tpu.memory_space<vmem>>, vector<16x3xbf16>
    %cst_21 = arith.constant dense<0.000000e+00> : vector<8x3xf32>
    %22 = tpu.matmul %0, %21, %cst_21 {dimension_numbers = #tpu.dot_dimension_numbers<[1], [0], [0], [1], [0, 0, 1, 1], [], []>} : vector<8x16xbf16>, vector<16x3xbf16>, vector<8x3xf32> -> vector<8x3xf32>
    %c0_22 = arith.constant 0 : index
    %c0_23 = arith.constant 0 : index
    %23 = vector.load %arg8[%c0_22, %c0_23] : memref<8x3xbf16, #tpu.memory_space<vmem>>, vector<8x3xbf16>
    %cst_24 = arith.constant dense<0.000000e+00> : vector<8x3xf32>
    %24 = tpu.matmul %1, %23, %cst_24 {dimension_numbers = #tpu.dot_dimension_numbers<[1], [0], [0], [1], [0, 0, 1, 1], [], []>} : vector<8x8xbf16>, vector<8x3xbf16>, vector<8x3xf32> -> vector<8x3xf32>
    %25 = arith.addf %22, %24 : vector<8x3xf32>
    %c0_25 = arith.constant 0 : index
    %c0_26 = arith.constant 0 : index
    %26 = vector.load %arg9[%c0_25, %c0_26] : memref<24x3xbf16, #tpu.memory_space<vmem>>, vector<24x3xbf16>
    %cst_27 = arith.constant dense<0.000000e+00> : vector<8x3xf32>
    %27 = tpu.matmul %2, %26, %cst_27 {dimension_numbers = #tpu.dot_dimension_numbers<[1], [0], [0], [1], [0, 0, 1, 1], [], []>} : vector<8x24xbf16>, vector<24x3xbf16>, vector<8x3xf32> -> vector<8x3xf32>
    %28 = arith.addf %25, %27 : vector<8x3xf32>
    %c0_28 = arith.constant 0 : index
    %c0_29 = arith.constant 0 : index
    %29 = vector.load %arg13[%c0_28, %c0_29] : memref<1x3xf32, #tpu.memory_space<vmem>>, vector<1x3xf32>
    %30 = vector.broadcast %29 : vector<1x3xf32> to vector<8x3xf32>
    %31 = arith.addf %28, %30 : vector<8x3xf32>
    %cst_30 = arith.constant dense<0xFF800000> : vector<8xf32>
    %32 = vector.multi_reduction <maximumf>, %31, %cst_30 [1] : vector<8x3xf32> to vector<8xf32>
    %33 = vector.shape_cast %32 : vector<8xf32> to vector<8x1xf32>
    %34 = vector.broadcast %33 : vector<8x1xf32> to vector<8x3xf32>
    %35 = arith.subf %31, %34 : vector<8x3xf32>
    %36 = math.exp %35 : vector<8x3xf32>
    %cst_31 = arith.constant dense<0.000000e+00> : vector<8xf32>
    %37 = vector.multi_reduction <add>, %36, %cst_31 [1] : vector<8x3xf32> to vector<8xf32>
    %38 = vector.shape_cast %37 : vector<8xf32> to vector<8x1xf32>
    %39 = vector.broadcast %38 : vector<8x1xf32> to vector<8x3xf32>
    %40 = arith.divf %36, %39 : vector<8x3xf32>
    %41 = vector.extract_strided_slice %40 {offsets = [0, 0], sizes = [8, 1], strides = [1, 1]} : vector<8x3xf32> to vector<8x1xf32>
    %42 = vector.broadcast %41 : vector<8x1xf32> to vector<8x32xf32>
    %43 = arith.mulf %42, %8 : vector<8x32xf32>
    %44 = vector.extract_strided_slice %40 {offsets = [0, 1], sizes = [8, 1], strides = [1, 1]} : vector<8x3xf32> to vector<8x1xf32>
    %45 = vector.broadcast %44 : vector<8x1xf32> to vector<8x32xf32>
    %46 = arith.mulf %45, %14 : vector<8x32xf32>
    %47 = arith.addf %43, %46 : vector<8x32xf32>
    %48 = vector.extract_strided_slice %40 {offsets = [0, 2], sizes = [8, 1], strides = [1, 1]} : vector<8x3xf32> to vector<8x1xf32>
    %49 = vector.broadcast %48 : vector<8x1xf32> to vector<8x32xf32>
    %50 = arith.mulf %49, %20 : vector<8x32xf32>
    %51 = arith.addf %47, %50 : vector<8x32xf32>
    %c0_32 = arith.constant 0 : index
    %c0_33 = arith.constant 0 : index
    %52 = vector.load %arg14[%c0_32, %c0_33] : memref<8x32xf32, #tpu.memory_space<vmem>>, vector<8x32xf32>
    tpu.vector_store %arg14[%c0_32, %c0_33], %51 {strides = array<i32>} : memref<8x32xf32, #tpu.memory_space<vmem>>, vector<8x32xf32>,
    %c0_34 = arith.constant 0 : index
    %c0_35 = arith.constant 0 : index
    %53 = vector.load %arg15[%c0_34, %c0_35] : memref<8x3xf32, #tpu.memory_space<vmem>>, vector<8x3xf32>
    tpu.vector_store %arg15[%c0_34, %c0_35], %40 {strides = array<i32>} : memref<8x3xf32, #tpu.memory_space<vmem>>, vector<8x3xf32>,
    return
  }
  func.func @transform_0(%arg0: i32) -> (i32, i32) {
    %c0_i32 = arith.constant 0 : i32
    %c0_i32_0 = arith.constant 0 : i32
    return %arg0, %c0_i32 : i32, i32
  }
  func.func @transform_1(%arg0: i32) -> (i32, i32) {
    %c0_i32 = arith.constant 0 : i32
    %c0_i32_0 = arith.constant 0 : i32
    return %arg0, %c0_i32 : i32, i32
  }
  func.func @transform_2(%arg0: i32) -> (i32, i32) {
    %c0_i32 = arith.constant 0 : i32
    %c0_i32_0 = arith.constant 0 : i32
    return %arg0, %c0_i32 : i32, i32
  }
  func.func @transform_3(%arg0: i32) -> (i32, i32) {
    %c0_i32 = arith.constant 0 : i32
    %c0_i32_0 = arith.constant 0 : i32
    %c0_i32_1 = arith.constant 0 : i32
    return %c0_i32, %c0_i32_0 : i32, i32
  }
  func.func @transform_4(%arg0: i32) -> (i32, i32) {
    %c0_i32 = arith.constant 0 : i32
    %c0_i32_0 = arith.constant 0 : i32
    %c0_i32_1 = arith.constant 0 : i32
    return %c0_i32, %c0_i32_0 : i32, i32
  }
  func.func @transform_5(%arg0: i32) -> (i32, i32) {
    %c0_i32 = arith.constant 0 : i32
    %c0_i32_0 = arith.constant 0 : i32
    %c0_i32_1 = arith.constant 0 : i32
    return %c0_i32, %c0_i32_0 : i32, i32
  }
  func.func @transform_6(%arg0: i32) -> (i32, i32) {
    %c0_i32 = arith.constant 0 : i32
    %c0_i32_0 = arith.constant 0 : i32
    %c0_i32_1 = arith.constant 0 : i32
    return %c0_i32, %c0_i32_0 : i32, i32
  }
  func.func @transform_7(%arg0: i32) -> (i32, i32) {
    %c0_i32 = arith.constant 0 : i32
    %c0_i32_0 = arith.constant 0 : i32
    %c0_i32_1 = arith.constant 0 : i32
    return %c0_i32, %c0_i32_0 : i32, i32
  }
  func.func @transform_8(%arg0: i32) -> (i32, i32) {
    %c0_i32 = arith.constant 0 : i32
    %c0_i32_0 = arith.constant 0 : i32
    %c0_i32_1 = arith.constant 0 : i32
    return %c0_i32, %c0_i32_0 : i32, i32
  }
  func.func @transform_9(%arg0: i32) -> (i32, i32) {
    %c0_i32 = arith.constant 0 : i32
    %c0_i32_0 = arith.constant 0 : i32
    %c0_i32_1 = arith.constant 0 : i32
    return %c0_i32, %c0_i32_0 : i32, i32
  }
  func.func @transform_10(%arg0: i32) -> (i32, i32) {
    %c0_i32 = arith.constant 0 : i32
    %c0_i32_0 = arith.constant 0 : i32
    %c0_i32_1 = arith.constant 0 : i32
    return %c0_i32, %c0_i32_0 : i32, i32
  }
  func.func @transform_11(%arg0: i32) -> (i32, i32) {
    %c0_i32 = arith.constant 0 : i32
    %c0_i32_0 = arith.constant 0 : i32
    %c0_i32_1 = arith.constant 0 : i32
    return %c0_i32, %c0_i32_0 : i32, i32
  }
  func.func @transform_12(%arg0: i32) -> (i32, i32) {
    %c0_i32 = arith.constant 0 : i32
    %c0_i32_0 = arith.constant 0 : i32
    %c0_i32_1 = arith.constant 0 : i32
    return %c0_i32, %c0_i32_0 : i32, i32
  }
  func.func @transform_13(%arg0: i32) -> (i32, i32) {
    %c0_i32 = arith.constant 0 : i32
    %c0_i32_0 = arith.constant 0 : i32
    return %arg0, %c0_i32 : i32, i32
  }
  func.func @transform_14(%arg0: i32) -> (i32, i32) {
    %c0_i32 = arith.constant 0 : i32
    %c0_i32_0 = arith.constant 0 : i32
    return %arg0, %c0_i32 : i32, i32
  }
}

</mosaic_0001>

<llo_original>
// kernel: tpu_custom_call.1
$region0: #{tpu_custom_call.1}
  #allocation0 [shape = 'u32[]', space=smem, size = 0x4, offset = 0x4, fixed_abs, tag = 'smem constant byte address 0x4 - core index']
  #allocation1 [shape = 'u32[144,128]{1,0:T(1,128)}', space=vmem, size = 0x12000, scoped, tag = 'internal scratch']
  %s0 = inlined_call_operand.vmem [shape: bf16[8,16], index: 0, kind: input, shape index: {}]
  %s1 = inlined_call_operand.vmem [shape: bf16[8,8], index: 1, kind: input, shape index: {}]
  %s2 = inlined_call_operand.vmem [shape: bf16[8,24], index: 2, kind: input, shape index: {}]
  %s3 = inlined_call_operand.vmem [shape: bf16[16,32], index: 3, kind: input, shape index: {}]
  %s4 = inlined_call_operand.vmem [shape: bf16[8,32], index: 4, kind: input, shape index: {}]
  %s5 = inlined_call_operand.vmem [shape: bf16[24,32], index: 5, kind: input, shape index: {}]
  %s6 = inlined_call_operand.vmem [shape: bf16[16,3], index: 6, kind: input, shape index: {}]
  %s7 = inlined_call_operand.vmem [shape: bf16[8,3], index: 7, kind: input, shape index: {}]
  %s8 = inlined_call_operand.vmem [shape: bf16[24,3], index: 8, kind: input, shape index: {}]
  %s9 = inlined_call_operand.vmem [shape: f32[1,32], index: 9, kind: input, shape index: {}]
  %s10 = inlined_call_operand.vmem [shape: f32[1,32], index: 10, kind: input, shape index: {}]
  %s11 = inlined_call_operand.vmem [shape: f32[1,32], index: 11, kind: input, shape index: {}]
  %s12 = inlined_call_operand.vmem [shape: f32[1,3], index: 12, kind: input, shape index: {}]
  %s13 = inlined_call_operand.hbm [shape: f32[8,32], index: 13, kind: output, shape index: {0}]
  %s14 = inlined_call_operand.vmem [shape: f32[8,3], index: 14, kind: output, shape index: {1}]
  %15 = xla_tuple %s13, %s14
  %s16 = sld [smem:[#allocation0]]
  $region70: #{tpu_custom_call.1} parent=0
    _
  %s18 = ssub.s32 1, %s16
  %s19 = scalar_select 0, %s18, %s16
  $region1: #{tpu_custom_call.1} parent=0
    #allocation2 [shape = 'u8[4096]{0}', space=vmem, size = 0x1000, scoped, tag = 'output window, operand 0, single buffered']
    #allocation3 [shape = 's32[1]{0}', space=sflag, size = 0x4, scoped, tag = 'scoped memory for tpu_custom_call.1']
    %20 = vsyncpa [#allocation3], 0
    // Predicated region
    $region2: #{tpu_custom_call.1} parent=1 // pred_check
      _
    $region3: #{tpu_custom_call.1} parent=1 // pred_check_branch
      %22 = sbr.rel (0) target = $region5
    $region4: #{tpu_custom_call.1} parent=1 // pred_region
      _
    $region5: #{tpu_custom_call.1} parent=1 // pred_fallthru
      _
    // Predicated region
    $region6: #{tpu_custom_call.1} parent=1 // pred_check
      _
    $region7: #{tpu_custom_call.1} parent=1 // pred_check_branch
      %24 = sbr.rel (0) target = $region9
    $region8: #{tpu_custom_call.1} parent=1 // pred_region
      _
    $region9: #{tpu_custom_call.1} parent=1 // pred_fallthru
      _
    // Predicated region
    $region10: #{tpu_custom_call.1} parent=1 // pred_check
      _
    $region11: #{tpu_custom_call.1} parent=1 // pred_check_branch
      %26 = sbr.rel (0) target = $region13
    $region12: #{tpu_custom_call.1} parent=1 // pred_region
      _
    $region13: #{tpu_custom_call.1} parent=1 // pred_fallthru
      _
    // Predicated region
    $region14: #{tpu_custom_call.1} parent=1 // pred_check
      _
    $region15: #{tpu_custom_call.1} parent=1 // pred_check_branch
      %28 = sbr.rel (0) target = $region17
    $region16: #{tpu_custom_call.1} parent=1 // pred_region
      _
    $region17: #{tpu_custom_call.1} parent=1 // pred_fallthru
      _
    // Predicated region
    $region18: #{tpu_custom_call.1} parent=1 // pred_check
      _
    $region19: #{tpu_custom_call.1} parent=1 // pred_check_branch
      %30 = sbr.rel (0) target = $region21
    $region20: #{tpu_custom_call.1} parent=1 // pred_region
      _
    $region21: #{tpu_custom_call.1} parent=1 // pred_fallthru
      _
    // Predicated region
    $region22: #{tpu_custom_call.1} parent=1 // pred_check
      _
    $region23: #{tpu_custom_call.1} parent=1 // pred_check_branch
      %32 = sbr.rel (0) target = $region25
    $region24: #{tpu_custom_call.1} parent=1 // pred_region
      _
    $region25: #{tpu_custom_call.1} parent=1 // pred_fallthru
      _
    // Predicated region
    $region26: #{tpu_custom_call.1} parent=1 // pred_check
      _
    $region27: #{tpu_custom_call.1} parent=1 // pred_check_branch
      %34 = sbr.rel (0) target = $region29
    $region28: #{tpu_custom_call.1} parent=1 // pred_region
      _
    $region29: #{tpu_custom_call.1} parent=1 // pred_fallthru
      _
    // Predicated region
    $region30: #{tpu_custom_call.1} parent=1 // pred_check
      _
    $region31: #{tpu_custom_call.1} parent=1 // pred_check_branch
      %36 = sbr.rel (0) target = $region33
    $region32: #{tpu_custom_call.1} parent=1 // pred_region
      _
    $region33: #{tpu_custom_call.1} parent=1 // pred_fallthru
      _
    // Predicated region
    $region34: #{tpu_custom_call.1} parent=1 // pred_check
      _
    $region35: #{tpu_custom_call.1} parent=1 // pred_check_branch
      %38 = sbr.rel (0) target = $region37
    $region36: #{tpu_custom_call.1} parent=1 // pred_region
      _
    $region37: #{tpu_custom_call.1} parent=1 // pred_fallthru
      _
    // Predicated region
    $region38: #{tpu_custom_call.1} parent=1 // pred_check
      _
    $region39: #{tpu_custom_call.1} parent=1 // pred_check_branch
      %40 = sbr.rel (0) target = $region41
    $region40: #{tpu_custom_call.1} parent=1 // pred_region
      _
    $region41: #{tpu_custom_call.1} parent=1 // pred_fallthru
      _
    // Predicated region
    $region42: #{tpu_custom_call.1} parent=1 // pred_check
      _
    $region43: #{tpu_custom_call.1} parent=1 // pred_check_branch
      %42 = sbr.rel (0) target = $region45
    $region44: #{tpu_custom_call.1} parent=1 // pred_region
      _
    $region45: #{tpu_custom_call.1} parent=1 // pred_fallthru
      _
    // Predicated region
    $region46: #{tpu_custom_call.1} parent=1 // pred_check
      _
    $region47: #{tpu_custom_call.1} parent=1 // pred_check_branch
      %44 = sbr.rel (0) target = $region49
    $region48: #{tpu_custom_call.1} parent=1 // pred_region
      _
    $region49: #{tpu_custom_call.1} parent=1 // pred_fallthru
      _
    // Predicated region
    $region50: #{tpu_custom_call.1} parent=1 // pred_check
      _
    $region51: #{tpu_custom_call.1} parent=1 // pred_check_branch
      %46 = sbr.rel (0) target = $region53
    $region52: #{tpu_custom_call.1} parent=1 // pred_region
      _
    $region53: #{tpu_custom_call.1} parent=1 // pred_fallthru
      _
    %v48 = vld [vmem:[%s0] sm:$0xf]
    %v49 = vld [vmem:[%s1] sm:$0xf]
    %v50 = vld [vmem:[%s2] sm:$0xf]
    %v51 = vld [vmem:[%s3] sm:$0xf]
    %v52 = vld [vmem:[%s3 + $0x4] sm:$0xf]
    %v53 = vld [vmem:[%s9] sm:$0x1]
    %v55 = vlaneseq
    %v56 = vshrl.u32 %v55, 7
    %v57 = vsub.s32 0, %v56
    %v58 = vrot.slane %v53, %v57
    %v62 = vunpack.c.l.b16 %v51
    %v63 = vunpack.c.l.b16 %v52
    %v64 = vpack.c.b16 %v63, %v62
    %vm66 = vcmask 130048
    %v68 = vsel %vm66, %v48, 0
    %70 = vmatprep.subr.bf16.mxu0 0
    %71 = vmatpush1.bf16.msra.mxu0 %v64
    %72 = vmatprep.subr.bf16.mxu0 0
    %73 = vmatpush1.bf16.msra.mxu0 0
    %74 = vmatprep.subr.bf16.mxu0 0
    %75 = vmatpush1.bf16.msra.mxu0 0
    %76 = vmatprep.subr.bf16.mxu0 0
    %77 = vmatpush1.bf16.msra.mxu0 0
    %78 = vmatprep.subr.bf16.mxu0 0
    %79 = vmatpush1.bf16.msra.mxu0 0
    %80 = vmatprep.subr.bf16.mxu0 0
    %81 = vmatpush1.bf16.msra.mxu0 0
    %82 = vmatprep.subr.bf16.mxu0 0
    %83 = vmatpush1.bf16.msra.mxu0 0
    %84 = vmatprep.subr.bf16.mxu0 0
    %85 = vmatpush1.bf16.msra.mxu0 0
    %86 = vmatprep.subr.bf16.mxu0 0
    %87 = vmatpush1.bf16.msra.mxu0 0
    %88 = vmatprep.subr.bf16.mxu0 0
    %89 = vmatpush1.bf16.msra.mxu0 0
    %90 = vmatprep.subr.bf16.mxu0 0
    %91 = vmatpush1.bf16.msra.mxu0 0
    %92 = vmatprep.subr.bf16.mxu0 0
    %93 = vmatpush1.bf16.msra.mxu0 0
    %94 = vmatprep.subr.bf16.mxu0 0
    %95 = vmatpush1.bf16.msra.mxu0 0
    %96 = vmatprep.subr.bf16.mxu0 0
    %97 = vmatpush1.bf16.msra.mxu0 0
    %98 = vmatprep.subr.bf16.mxu0 0
    %99 = vmatpush1.bf16.msra.mxu0 0
    %100 = vmatprep.subr.bf16.mxu0 0
    %101 = vmatpush1.bf16.msra.mxu0 0
    %102 = vmatprep.mubr.bf16.mxu0 0
    %103 = vmatmul.mubr.bf16.gmra.mrb[0].mxu0 %v68
    %v104 = vpop.f32.mrb[0].mxu0
    %v105 = vadd.f32 %v58, %v104
    %v106 = vpop.f32.mrb[0].mxu0
    %v107 = vpop.f32.mrb[0].mxu0
    %v108 = vpop.f32.mrb[0].mxu0
    %109 = vdwg.mxu0
    %v110 = vtanh.pop %v105
    %v111 = vld [vmem:[%s4] sm:$0xf]
    %v112 = vld [vmem:[%s10] sm:$0x1]
    %v114 = vlaneseq
    %v115 = vshrl.u32 %v114, 7
    %v116 = vsub.s32 0, %v115
    %v117 = vrot.slane %v112, %v116
    %vm119 = vcmask 64512
    %v121 = vsel %vm119, %v49, 0
    %vm123 = vcmask 1043456
    %v125 = vsel %vm123, %v111, 0
    %127 = vmatprep.subr.bf16.mxu0 0
    %128 = vmatpush1.bf16.msra.mxu0 %v125
    %129 = vmatprep.subr.bf16.mxu0 0
    %130 = vmatpush1.bf16.msra.mxu0 0
    %131 = vmatprep.subr.bf16.mxu0 0
    %132 = vmatpush1.bf16.msra.mxu0 0
    %133 = vmatprep.subr.bf16.mxu0 0
    %134 = vmatpush1.bf16.msra.mxu0 0
    %135 = vmatprep.subr.bf16.mxu0 0
    %136 = vmatpush1.bf16.msra.mxu0 0
    %137 = vmatprep.subr.bf16.mxu0 0
    %138 = vmatpush1.bf16.msra.mxu0 0
    %139 = vmatprep.subr.bf16.mxu0 0
    %140 = vmatpush1.bf16.msra.mxu0 0
    %141 = vmatprep.subr.bf16.mxu0 0
    %142 = vmatpush1.bf16.msra.mxu0 0
    %143 = vmatprep.subr.bf16.mxu0 0
    %144 = vmatpush1.bf16.msra.mxu0 0
    %145 = vmatprep.subr.bf16.mxu0 0
    %146 = vmatpush1.bf16.msra.mxu0 0
    %147 = vmatprep.subr.bf16.mxu0 0
    %148 = vmatpush1.bf16.msra.mxu0 0
    %149 = vmatprep.subr.bf16.mxu0 0
    %150 = vmatpush1.bf16.msra.mxu0 0
    %151 = vmatprep.subr.bf16.mxu0 0
    %152 = vmatpush1.bf16.msra.mxu0 0
    %153 = vmatprep.subr.bf16.mxu0 0
    %154 = vmatpush1.bf16.msra.mxu0 0
    %155 = vmatprep.subr.bf16.mxu0 0
    %156 = vmatpush1.bf16.msra.mxu0 0
    %157 = vmatprep.subr.bf16.mxu0 0
    %158 = vmatpush1.bf16.msra.mxu0 0
    %159 = vmatprep.mubr.bf16.mxu0 0
    %160 = vmatmul.mubr.bf16.gmra.mrb[0].mxu0 %v121
    %v161 = vpop.f32.mrb[0].mxu0
    %v162 = vadd.f32 %v117, %v161
    %v163 = vpop.f32.mrb[0].mxu0
    %v164 = vpop.f32.mrb[0].mxu0
    %v165 = vpop.f32.mrb[0].mxu0
    %166 = vdwg.mxu0
    %v167 = vtanh.pop %v162
    %v168 = vld [vmem:[%s5] sm:$0xf]
    %v169 = vld [vmem:[%s5 + $0x4] sm:$0xf]
    %v170 = vld [vmem:[%s5 + $0x8] sm:$0xf]
    %v171 = vld [vmem:[%s11] sm:$0x1]
    %v173 = vlaneseq
    %v174 = vshrl.u32 %v173, 7
    %v175 = vsub.s32 0, %v174
    %v176 = vrot.slane %v171, %v175
    %v181 = vunpack.c.l.b16 %v168
    %v182 = vunpack.c.l.b16 %v169
    %v183 = vunpack.c.l.b16 %v170
    %v184 = vpack.c.b16 %v182, %v181
    %v185 = vpack.c.b16 %v183, %v183
    %vm187 = vcmask 195584
    %v189 = vsel %vm187, %v50, 0
    %v192 = vsel %vm123, %v185, 0
    %194 = vmatprep.subr.bf16.mxu0 0
    %195 = vmatpush1.bf16.msra.mxu0 %v184
    %196 = vmatprep.subr.bf16.mxu0 0
    %197 = vmatpush1.bf16.msra.mxu0 %v192
    %198 = vmatprep.subr.bf16.mxu0 0
    %199 = vmatpush1.bf16.msra.mxu0 0
    %200 = vmatprep.subr.bf16.mxu0 0
    %201 = vmatpush1.bf16.msra.mxu0 0
    %202 = vmatprep.subr.bf16.mxu0 0
    %203 = vmatpush1.bf16.msra.mxu0 0
    %204 = vmatprep.subr.bf16.mxu0 0
    %205 = vmatpush1.bf16.msra.mxu0 0
    %206 = vmatprep.subr.bf16.mxu0 0
    %207 = vmatpush1.bf16.msra.mxu0 0
    %208 = vmatprep.subr.bf16.mxu0 0
    %209 = vmatpush1.bf16.msra.mxu0 0
    %210 = vmatprep.subr.bf16.mxu0 0
    %211 = vmatpush1.bf16.msra.mxu0 0
    %212 = vmatprep.subr.bf16.mxu0 0
    %213 = vmatpush1.bf16.msra.mxu0 0
    %214 = vmatprep.subr.bf16.mxu0 0
    %215 = vmatpush1.bf16.msra.mxu0 0
    %216 = vmatprep.subr.bf16.mxu0 0
    %217 = vmatpush1.bf16.msra.mxu0 0
    %218 = vmatprep.subr.bf16.mxu0 0
    %219 = vmatpush1.bf16.msra.mxu0 0
    %220 = vmatprep.subr.bf16.mxu0 0
    %221 = vmatpush1.bf16.msra.mxu0 0
    %222 = vmatprep.subr.bf16.mxu0 0
    %223 = vmatpush1.bf16.msra.mxu0 0
    %224 = vmatprep.subr.bf16.mxu0 0
    %225 = vmatpush1.bf16.msra.mxu0 0
    %226 = vmatprep.mubr.bf16.mxu0 0
    %227 = vmatmul.mubr.bf16.gmra.mrb[0].mxu0 %v189
    %v228 = vpop.f32.mrb[0].mxu0
    %v229 = vadd.f32 %v176, %v228
    %v230 = vpop.f32.mrb[0].mxu0
    %v231 = vpop.f32.mrb[0].mxu0
    %v232 = vpop.f32.mrb[0].mxu0
    %233 = vdwg.mxu0
    %v234 = vtanh.pop %v229
    %v235 = vld [vmem:[%s6] sm:$0xf]
    %v236 = vld [vmem:[%s6 + $0x4] sm:$0xf]
    %v237 = vld [vmem:[%s7] sm:$0xf]
    %v239 = vsel %vm123, %v237, 0
    %241 = vmatprep.subr.bf16.mxu0 0
    %242 = vmatpush1.bf16.msra.mxu0 %v239
    %243 = vmatprep.subr.bf16.mxu0 0
    %244 = vmatpush1.bf16.msra.mxu0 0
    %245 = vmatprep.subr.bf16.mxu0 0
    %246 = vmatpush1.bf16.msra.mxu0 0
    %247 = vmatprep.subr.bf16.mxu0 0
    %248 = vmatpush1.bf16.msra.mxu0 0
    %249 = vmatprep.subr.bf16.mxu0 0
    %250 = vmatpush1.bf16.msra.mxu0 0
    %251 = vmatprep.subr.bf16.mxu0 0
    %252 = vmatpush1.bf16.msra.mxu0 0
    %253 = vmatprep.subr.bf16.mxu0 0
    %254 = vmatpush1.bf16.msra.mxu0 0
    %255 = vmatprep.subr.bf16.mxu0 0
    %256 = vmatpush1.bf16.msra.mxu0 0
    %257 = vmatprep.subr.bf16.mxu0 0
    %258 = vmatpush1.bf16.msra.mxu0 0
    %259 = vmatprep.subr.bf16.mxu0 0
    %260 = vmatpush1.bf16.msra.mxu0 0
    %261 = vmatprep.subr.bf16.mxu0 0
    %262 = vmatpush1.bf16.msra.mxu0 0
    %263 = vmatprep.subr.bf16.mxu0 0
    %264 = vmatpush1.bf16.msra.mxu0 0
    %265 = vmatprep.subr.bf16.mxu0 0
    %266 = vmatpush1.bf16.msra.mxu0 0
    %267 = vmatprep.subr.bf16.mxu0 0
    %268 = vmatpush1.bf16.msra.mxu0 0
    %269 = vmatprep.subr.bf16.mxu0 0
    %270 = vmatpush1.bf16.msra.mxu0 0
    %271 = vmatprep.subr.bf16.mxu0 0
    %272 = vmatpush1.bf16.msra.mxu0 0
    %273 = vmatprep.mubr.bf16.mxu0 0
    %274 = vmatmul.mubr.bf16.gmra.mrb[0].mxu0 %v121
    %v275 = vpop.f32.mrb[0].mxu0
    %v276 = vadd.f32 0.0, %v275
    %v277 = vpop.f32.mrb[0].mxu0
    %v278 = vpop.f32.mrb[0].mxu0
    %v279 = vpop.f32.mrb[0].mxu0
    %280 = vdwg.mxu0
    %v283 = vunpack.c.l.b16 %v235
    %v284 = vunpack.c.l.b16 %v236
    %v285 = vpack.c.b16 %v284, %v283
    %287 = vmatprep.subr.bf16.mxu0 0
    %288 = vmatpush1.bf16.msra.mxu0 %v285
    %289 = vmatprep.subr.bf16.mxu0 0
    %290 = vmatpush1.bf16.msra.mxu0 0
    %291 = vmatprep.subr.bf16.mxu0 0
    %292 = vmatpush1.bf16.msra.mxu0 0
    %293 = vmatprep.subr.bf16.mxu0 0
    %294 = vmatpush1.bf16.msra.mxu0 0
    %295 = vmatprep.subr.bf16.mxu0 0
    %296 = vmatpush1.bf16.msra.mxu0 0
    %297 = vmatprep.subr.bf16.mxu0 0
    %298 = vmatpush1.bf16.msra.mxu0 0
    %299 = vmatprep.subr.bf16.mxu0 0
    %300 = vmatpush1.bf16.msra.mxu0 0
    %301 = vmatprep.subr.bf16.mxu0 0
    %302 = vmatpush1.bf16.msra.mxu0 0
    %303 = vmatprep.subr.bf16.mxu0 0
    %304 = vmatpush1.bf16.msra.mxu0 0
    %305 = vmatprep.subr.bf16.mxu0 0
    %306 = vmatpush1.bf16.msra.mxu0 0
    %307 = vmatprep.subr.bf16.mxu0 0
    %308 = vmatpush1.bf16.msra.mxu0 0
    %309 = vmatprep.subr.bf16.mxu0 0
    %310 = vmatpush1.bf16.msra.mxu0 0
    %311 = vmatprep.subr.bf16.mxu0 0
    %312 = vmatpush1.bf16.msra.mxu0 0
    %313 = vmatprep.subr.bf16.mxu0 0
    %314 = vmatpush1.bf16.msra.mxu0 0
    %315 = vmatprep.subr.bf16.mxu0 0
    %316 = vmatpush1.bf16.msra.mxu0 0
    %317 = vmatprep.subr.bf16.mxu0 0
    %318 = vmatpush1.bf16.msra.mxu0 0
    %319 = vmatprep.mubr.bf16.mxu0 0
    %320 = vmatmul.mubr.bf16.gmra.mrb[0].mxu0 %v68
    %v321 = vpop.f32.mrb[0].mxu0
    %v322 = vadd.f32 %v276, %v321
    %v323 = vpop.f32.mrb[0].mxu0
    %v324 = vpop.f32.mrb[0].mxu0
    %v325 = vpop.f32.mrb[0].mxu0
    %326 = vdwg.mxu0
    %v327 = vld [vmem:[%s8] sm:$0xf]
    %v328 = vld [vmem:[%s8 + $0x4] sm:$0xf]
    %v329 = vld [vmem:[%s8 + $0x8] sm:$0xf]
    %v333 = vunpack.c.l.b16 %v327
    %v334 = vunpack.c.l.b16 %v328
    %v335 = vunpack.c.l.b16 %v329
    %v336 = vpack.c.b16 %v334, %v333
    %v337 = vpack.c.b16 %v335, %v335
    %v340 = vsel %vm123, %v337, 0
    %342 = vmatprep.subr.bf16.mxu0 0
    %343 = vmatpush1.bf16.msra.mxu0 %v336
    %344 = vmatprep.subr.bf16.mxu0 0
    %345 = vmatpush1.bf16.msra.mxu0 %v340
    %346 = vmatprep.subr.bf16.mxu0 0
    %347 = vmatpush1.bf16.msra.mxu0 0
    %348 = vmatprep.subr.bf16.mxu0 0
    %349 = vmatpush1.bf16.msra.mxu0 0
    %350 = vmatprep.subr.bf16.mxu0 0
    %351 = vmatpush1.bf16.msra.mxu0 0
    %352 = vmatprep.subr.bf16.mxu0 0
    %353 = vmatpush1.bf16.msra.mxu0 0
    %354 = vmatprep.subr.bf16.mxu0 0
    %355 = vmatpush1.bf16.msra.mxu0 0
    %356 = vmatprep.subr.bf16.mxu0 0
    %357 = vmatpush1.bf16.msra.mxu0 0
    %358 = vmatprep.subr.bf16.mxu0 0
    %359 = vmatpush1.bf16.msra.mxu0 0
    %360 = vmatprep.subr.bf16.mxu0 0
    %361 = vmatpush1.bf16.msra.mxu0 0
    %362 = vmatprep.subr.bf16.mxu0 0
    %363 = vmatpush1.bf16.msra.mxu0 0
    %364 = vmatprep.subr.bf16.mxu0 0
    %365 = vmatpush1.bf16.msra.mxu0 0
    %366 = vmatprep.subr.bf16.mxu0 0
    %367 = vmatpush1.bf16.msra.mxu0 0
    %368 = vmatprep.subr.bf16.mxu0 0
    %369 = vmatpush1.bf16.msra.mxu0 0
    %370 = vmatprep.subr.bf16.mxu0 0
    %371 = vmatpush1.bf16.msra.mxu0 0
    %372 = vmatprep.subr.bf16.mxu0 0
    %373 = vmatpush1.bf16.msra.mxu0 0
    %374 = vmatprep.mubr.bf16.mxu0 0
    %375 = vmatmul.mubr.bf16.gmra.mrb[0].mxu0 %v189
    %v376 = vpop.f32.mrb[0].mxu0
    %v377 = vadd.f32 0.0, %v376
    %v378 = vpop.f32.mrb[0].mxu0
    %v379 = vpop.f32.mrb[0].mxu0
    %v380 = vpop.f32.mrb[0].mxu0
    %381 = vdwg.mxu0
    %v382 = vadd.f32 %v322, %v377
    %v383 = vld [vmem:[%s12] sm:$0x1]
    %v385 = vlaneseq
    %v386 = vshrl.u32 %v385, 7
    %v387 = vsub.s32 0, %v386
    %v388 = vrot.slane %v383, %v387
    %v390 = vadd.f32 %v382, %v388
    %vm391 = vcmask 23552
    %v392 = vsel %vm391, %v390, -inf
    %393 = vmax.xlane.f32.xlu0 %v392
    %v394 = vpop.xlane.xlu0 %393
    %v395 = vsub.f32 %v390, %v394
    %v396 = vmul.f32 %v395, 1.442695
    %v397 = vpow.pop %v396
    %v398 = vsel %vm391, %v397, 0.0
    %399 = vadd.xlane.f32.xlu0 %v398
    %v400 = vpop.xlane.xlu0 %399
    %v401 = vrcp.pop %v400
    %v402 = vmul.f32 %v397, %v401
    %404 = vset.pattern.permute.xlu0 0
    %405 = vperm.xlu0 %404, %v402
    %v406 = vpop.permute.xlu0 %405
    %v408 = vmul.f32 %v406, %v110
    %409 = vset.pattern.permute.xlu0 1
    %410 = vperm.xlu0 %409, %v402
    %v411 = vpop.permute.xlu0 %410
    %v413 = vmul.f32 %v411, %v167
    %v414 = vadd.f32 %v408, %v413
    %415 = vset.pattern.permute.xlu0 2
    %416 = vperm.xlu0 %415, %v402
    %v417 = vpop.permute.xlu0 %416
    %v419 = vmul.f32 %v417, %v234
    %v420 = vadd.f32 %v414, %v419
    %vm421 = vcmask 261120
    %422 = vst.msk [vmem:[#allocation2] sm:$0xff] %vm421, %v420
    %423 = vst.msk [vmem:[%s14] sm:$0xff] %vm391, %v402
    // Predicated region
    $region54: #{tpu_custom_call.1} parent=1 // pred_check
      _
    $region55: #{tpu_custom_call.1} parent=1 // pred_check_branch
      %425 = sbr.rel (0) target = $region57
    $region56: #{tpu_custom_call.1} parent=1 // pred_region
      %s427 = ssub.s32 128, 128
      %428 = vsyncadd [#allocation3], %s427
      %s430 = sshll.u32 [#allocation2], 4
      %s431 = int_to_ptr.vmem [resolvable:$true] %s430
      %433 = dma.vmem_to_hbm [thread:$0]  %s431, 128, %s13, [#allocation3]
    $region57: #{tpu_custom_call.1} parent=1 // pred_fallthru
      _
    // Predicated region
    $region58: #{tpu_custom_call.1} parent=1 // pred_check
      _
    $region59: #{tpu_custom_call.1} parent=1 // pred_check_branch
      %435 = sbr.rel (0) target = $region61
    $region60: #{tpu_custom_call.1} parent=1 // pred_region
      _
    $region61: #{tpu_custom_call.1} parent=1 // pred_fallthru
      _
    // Predicated region
    $region62: #{tpu_custom_call.1} parent=1 // pred_check
      _
    $region63: #{tpu_custom_call.1} parent=1 // pred_check_branch
      %437 = sbr.rel (0) target = $region65
    $region64: #{tpu_custom_call.1} parent=1 // pred_region
      %438 = dma.done [#allocation3], 128
    $region65: #{tpu_custom_call.1} parent=1 // pred_fallthru
      _
    // Predicated region
    $region66: #{tpu_custom_call.1} parent=1 // pred_check
      _
    $region67: #{tpu_custom_call.1} parent=1 // pred_check_branch
      %440 = sbr.rel (0) target = $region69
    $region68: #{tpu_custom_call.1} parent=1 // pred_region
      _
    $region69: #{tpu_custom_call.1} parent=1 // pred_fallthru
      _
    %441 = vsyncpa [#allocation3], 1

</llo_original>
